<compile_context>
chip_gen: v7x
topology: tpu7x:2x2x1
jax: 0.10.0
libtpu: 0.0.40
codegen_flags: <defaults>
</compile_context>

<pallas_src>
import jax
import jax.numpy as jnp
from jax import lax
from jax.experimental import pallas as pl
from jax.experimental.pallas import tpu as pltpu

_EPS = 1e-5


def _layernorm_noaffine(h):
    """LayerNorm over the (full, unpadded) last dim; affine folded into the
    following Linear at pack time."""
    mu = jnp.mean(h, axis=-1, keepdims=True)
    d = h - mu
    var = jnp.mean(d * d, axis=-1, keepdims=True)
    return d * lax.rsqrt(var + _EPS)


def actor_kernel(x_ref, w1_ref, w2_ref, wo_ref, b1_ref, b2_ref, bo_ref, out_ref):
    x = x_ref[...]                                          # (TB, obs_dim) f32

    # MLPBase.feature_norm (affine folded into w1/b1), fc1: Linear -> ReLU
    n = _layernorm_noaffine(x)
    h = jnp.dot(n.astype(jnp.bfloat16), w1_ref[...],
                preferred_element_type=jnp.float32) + b1_ref[...]
    h = jnp.maximum(h, 0.0)

    # fc1 LayerNorm (affine folded into w2/b2), fc2[0]: Linear -> ReLU
    n = _layernorm_noaffine(h)
    h = jnp.dot(n.astype(jnp.bfloat16), w2_ref[...],
                preferred_element_type=jnp.float32) + b2_ref[...]
    h = jnp.maximum(h, 0.0)

    # fc2 LayerNorm (affine folded into wo/bo), ACTLayer.action_out
    n = _layernorm_noaffine(h)
    out_ref[...] = jnp.dot(n.astype(jnp.bfloat16), wo_ref[...],
                           preferred_element_type=jnp.float32) + bo_ref[...]


def _fold_ln_into_linear(g, b_ln, w, b_lin):
    """LN(x)*g + b followed by @W + b_lin  ==  LN(x) @ (diag(g)W) + (b@W + b_lin)."""
    g = g.reshape(-1).astype(jnp.float32)
    b_ln = b_ln.reshape(1, -1).astype(jnp.float32)
    w = w.astype(jnp.float32)
    b_lin = b_lin.reshape(1, -1).astype(jnp.float32)
    return g[:, None] * w, b_lin + b_ln @ w


def maddpg_actor_forward(x, params, *, block_b=1024):
    B, obs_dim = x.shape
    hidden = params["w1"].shape[1]
    act_dim = params["wo"].shape[1]

    # ---- fold LN affines into the following Linear layers (trace-time) -----
    w1, b1 = _fold_ln_into_linear(params["ln0g"], params["ln0b"],
                                  params["w1"], params["b1"])
    w2, b2 = _fold_ln_into_linear(params["ln1g"], params["ln1b"],
                                  params["w2"], params["b2"])
    wo, bo = _fold_ln_into_linear(params["ln2g"], params["ln2b"],
                                  params["wo"], params["bo"])
    w1 = w1.astype(jnp.bfloat16)
    w2 = w2.astype(jnp.bfloat16)
    wo = wo.astype(jnp.bfloat16)

    # ---- batch tiling: >=2 grid steps when possible (v7x dual-TC), rows are
    # padded (not lanes) only when B doesn't tile evenly --------------------
    b_ceil8 = ((B + 7) // 8) * 8
    half = ((-(-b_ceil8 // 2) + 7) // 8) * 8           # round_up(cdiv(B,2), 8)
    tb = max(8, min(block_b, half))
    b_pad = ((B + tb - 1) // tb) * tb

    x = x.astype(jnp.float32)
    if b_pad != B:
        x = jnp.zeros((b_pad, obs_dim), jnp.float32).at[:B].set(x)

    grid = (b_pad // tb,)

    cost = pl.CostEstimate(
        flops=2 * b_pad * (obs_dim * hidden + hidden * hidden + hidden * act_dim),
        transcendentals=3 * b_pad,                     # one rsqrt per LN per row
        bytes_accessed=(b_pad * obs_dim * 4 + b_pad * act_dim * 4
                        + (w1.size + w2.size + wo.size) * 2
                        + (b1.size + b2.size + bo.size) * 4),
    )

    resident = lambda i: (0, 0)                        # weights/biases stay put

    out = pl.pallas_call(
        actor_kernel,
        out_shape=jax.ShapeDtypeStruct((b_pad, act_dim), jnp.float32),
        grid=grid,
        in_specs=[
            pl.BlockSpec((tb, obs_dim), lambda i: (i, 0)),   # x: streamed, native width
            pl.BlockSpec((obs_dim, hidden), resident),       # w1'
            pl.BlockSpec((hidden, hidden), resident),        # w2'
            pl.BlockSpec((hidden, act_dim), resident),       # wo'
            pl.BlockSpec((1, hidden), resident),             # b1'
            pl.BlockSpec((1, hidden), resident),             # b2'
            pl.BlockSpec((1, act_dim), resident),            # bo'
        ],
        out_specs=pl.BlockSpec((tb, act_dim), lambda i: (i, 0)),  # native-width out
        compiler_params=pltpu.CompilerParams(
            dimension_semantics=("parallel",)),
        cost_estimate=cost,
    )(x, w1, w2, wo, b1, b2, bo)

    return out[:B] if b_pad != B else out


# ----------------------------- references -----------------------------------

def _ln_ref(h, g, b):
    mu = jnp.mean(h, axis=-1, keepdims=True)
    var = jnp.mean((h - mu) ** 2, axis=-1, keepdims=True)
    return (h - mu) * lax.rsqrt(var + _EPS) * g + b


def reference_forward_f32(x, p):
    """Pure-f32, unfolded math (PyTorch-equivalent)."""
    x = _ln_ref(x, p["ln0g"], p["ln0b"])
    h = jnp.maximum(x @ p["w1"] + p["b1"], 0.0)
    h = _ln_ref(h, p["ln1g"], p["ln1b"])
    h = jnp.maximum(h @ p["w2"] + p["b2"], 0.0)
    h = _ln_ref(h, p["ln2g"], p["ln2b"])
    return h @ p["wo"] + p["bo"]


def reference_forward_folded_bf16(x, p):
    """Same math as the kernel: LN affines folded, bf16 MXU inputs, f32 acc."""
    w1, b1 = _fold_ln_into_linear(p["ln0g"], p["ln0b"], p["w1"], p["b1"])
    w2, b2 = _fold_ln_into_linear(p["ln1g"], p["ln1b"], p["w2"], p["b2"])
    wo, bo = _fold_ln_into_linear(p["ln2g"], p["ln2b"], p["wo"], p["bo"])

    def ln(h):
        mu = jnp.mean(h, axis=-1, keepdims=True)
        d = h - mu
        return d * lax.rsqrt(jnp.mean(d * d, axis=-1, keepdims=True) + _EPS)

    def dot(a, w):
        return jnp.dot(a.astype(jnp.bfloat16), w.astype(jnp.bfloat16),
                       preferred_element_type=jnp.float32)

    h = jnp.maximum(dot(ln(x), w1) + b1, 0.0)
    h = jnp.maximum(dot(ln(h), w2) + b2, 0.0)
    return dot(ln(h), wo) + bo


def make_params(key, obs_dim, hidden, act_dim):
    ks = jax.random.split(key, 8)
    scale = 0.1
    return {
        "ln0g": 1.0 + scale * jax.random.normal(ks[0], (1, obs_dim), jnp.float32),
        "ln0b": scale * jax.random.normal(ks[1], (1, obs_dim), jnp.float32),
        "w1": scale * jax.random.normal(ks[2], (obs_dim, hidden), jnp.float32),
        "b1": scale * jax.random.normal(ks[3], (1, hidden), jnp.float32),
        "ln1g": jnp.ones((1, hidden), jnp.float32),
        "ln1b": jnp.zeros((1, hidden), jnp.float32),
        "w2": scale * jax.random.normal(ks[4], (hidden, hidden), jnp.float32),
        "b2": scale * jax.random.normal(ks[5], (1, hidden), jnp.float32),
        "ln2g": jnp.ones((1, hidden), jnp.float32),
        "ln2b": jnp.zeros((1, hidden), jnp.float32),
        "wo": scale * jax.random.normal(ks[6], (hidden, act_dim), jnp.float32),
        "bo": scale * jax.random.normal(ks[7], (1, act_dim), jnp.float32),
    }


if __name__ == "__main__":
    B, OBS_DIM, HIDDEN, ACT_DIM = 8, 16, 64, 8

    key = jax.random.PRNGKey(0)
    kx, kp = jax.random.split(key)
    x = jax.random.normal(kx, (B, OBS_DIM), jnp.float32)
    params = make_params(kp, OBS_DIM, HIDDEN, ACT_DIM)

    out = jax.block_until_ready(maddpg_actor_forward(x, params))
    assert out.shape == (B, ACT_DIM)

    # Tight check: reference with the exact same folded/bf16 math.
    ref_matched = reference_forward_folded_bf16(x, params)
    assert jnp.allclose(out, ref_matched, atol=5e-3, rtol=5e-3), "matched-math mismatch"

    # Loose check: pure-f32 unfolded PyTorch-equivalent math.
    ref_f32 = reference_forward_f32(x, params)
    assert jnp.allclose(out, ref_f32, atol=5e-2, rtol=5e-2), "f32 reference mismatch"

    print("KERNEL_OK")
</pallas_src>

<mosaic_0001>
module attributes {stable_mosaic.version = 11 : i64} {
  func.func @actor_kernel(%arg0: i32, %arg1: memref<8x16xf32, #tpu.memory_space<vmem>>, %arg2: memref<16x64xbf16, #tpu.memory_space<vmem>>, %arg3: memref<64x64xbf16, #tpu.memory_space<vmem>>, %arg4: memref<64x8xbf16, #tpu.memory_space<vmem>>, %arg5: memref<1x64xf32, #tpu.memory_space<vmem>>, %arg6: memref<1x64xf32, #tpu.memory_space<vmem>>, %arg7: memref<1x8xf32, #tpu.memory_space<vmem>>, %arg8: memref<8x8xf32, #tpu.memory_space<vmem>>) attributes {dimension_semantics = [#tpu.dimension_semantics<parallel>], iteration_bounds = array<i64: 1>, scalar_prefetch = 0 : i64, scratch_operands = 0 : i64, tpu.core_type = #tpu.core_type<tc>, window_params = [{transform_indices = @transform_0, window_bounds = array<i64: 8, 16>}, {pipeline_mode = #tpu.pipeline_mode<synchronous>, transform_indices = @transform_1, window_bounds = array<i64: 16, 64>}, {pipeline_mode = #tpu.pipeline_mode<synchronous>, transform_indices = @transform_2, window_bounds = array<i64: 64, 64>}, {pipeline_mode = #tpu.pipeline_mode<synchronous>, transform_indices = @transform_3, window_bounds = array<i64: 64, 8>}, {pipeline_mode = #tpu.pipeline_mode<synchronous>, transform_indices = @transform_4, window_bounds = array<i64: 1, 64>}, {pipeline_mode = #tpu.pipeline_mode<synchronous>, transform_indices = @transform_5, window_bounds = array<i64: 1, 64>}, {pipeline_mode = #tpu.pipeline_mode<synchronous>, transform_indices = @transform_6, window_bounds = array<i64: 1, 8>}, {transform_indices = @transform_7, window_bounds = array<i64: 8, 8>}]} {
    %c0 = arith.constant 0 : index
    %c0_0 = arith.constant 0 : index
    %0 = vector.load %arg1[%c0, %c0_0] : memref<8x16xf32, #tpu.memory_space<vmem>>, vector<8x16xf32>
    %cst = arith.constant dense<0.000000e+00> : vector<8xf32>
    %1 = vector.multi_reduction <add>, %0, %cst [1] : vector<8x16xf32> to vector<8xf32>
    %2 = vector.shape_cast %1 : vector<8xf32> to vector<8x1xf32>
    %cst_1 = arith.constant 1.600000e+01 : f32
    %3 = vector.broadcast %cst_1 : f32 to vector<8x1xf32>
    %4 = arith.divf %2, %3 : vector<8x1xf32>
    %5 = vector.broadcast %4 : vector<8x1xf32> to vector<8x16xf32>
    %6 = arith.subf %0, %5 : vector<8x16xf32>
    %7 = arith.mulf %6, %6 : vector<8x16xf32>
    %cst_2 = arith.constant dense<0.000000e+00> : vector<8xf32>
    %8 = vector.multi_reduction <add>, %7, %cst_2 [1] : vector<8x16xf32> to vector<8xf32>
    %9 = vector.shape_cast %8 : vector<8xf32> to vector<8x1xf32>
    %cst_3 = arith.constant 1.600000e+01 : f32
    %10 = vector.broadcast %cst_3 : f32 to vector<8x1xf32>
    %11 = arith.divf %9, %10 : vector<8x1xf32>
    %cst_4 = arith.constant 9.99999974E-6 : f32
    %12 = vector.broadcast %cst_4 : f32 to vector<8x1xf32>
    %13 = arith.addf %11, %12 : vector<8x1xf32>
    %14 = math.rsqrt %13 : vector<8x1xf32>
    %15 = vector.broadcast %14 : vector<8x1xf32> to vector<8x16xf32>
    %16 = arith.mulf %6, %15 : vector<8x16xf32>
    %17 = arith.truncf %16 : vector<8x16xf32> to vector<8x16xbf16>
    %c0_5 = arith.constant 0 : index
    %c0_6 = arith.constant 0 : index
    %18 = vector.load %arg2[%c0_5, %c0_6] : memref<16x64xbf16, #tpu.memory_space<vmem>>, vector<16x64xbf16>
    %cst_7 = arith.constant dense<0.000000e+00> : vector<8x64xf32>
    %19 = tpu.matmul %17, %18, %cst_7 {dimension_numbers = #tpu.dot_dimension_numbers<[1], [0], [0], [1], [0, 0, 1, 1], [], []>} : vector<8x16xbf16>, vector<16x64xbf16>, vector<8x64xf32> -> vector<8x64xf32>
    %c0_8 = arith.constant 0 : index
    %c0_9 = arith.constant 0 : index
    %20 = vector.load %arg5[%c0_8, %c0_9] : memref<1x64xf32, #tpu.memory_space<vmem>>, vector<1x64xf32>
    %21 = vector.broadcast %20 : vector<1x64xf32> to vector<8x64xf32>
    %22 = arith.addf %19, %21 : vector<8x64xf32>
    %cst_10 = arith.constant 0.000000e+00 : f32
    %23 = vector.broadcast %cst_10 : f32 to vector<8x64xf32>
    %24 = arith.maximumf %22, %23 : vector<8x64xf32>
    %cst_11 = arith.constant dense<0.000000e+00> : vector<8xf32>
    %25 = vector.multi_reduction <add>, %24, %cst_11 [1] : vector<8x64xf32> to vector<8xf32>
    %26 = vector.shape_cast %25 : vector<8xf32> to vector<8x1xf32>
    %cst_12 = arith.constant 6.400000e+01 : f32
    %27 = vector.broadcast %cst_12 : f32 to vector<8x1xf32>
    %28 = arith.divf %26, %27 : vector<8x1xf32>
    %29 = vector.broadcast %28 : vector<8x1xf32> to vector<8x64xf32>
    %30 = arith.subf %24, %29 : vector<8x64xf32>
    %31 = arith.mulf %30, %30 : vector<8x64xf32>
    %cst_13 = arith.constant dense<0.000000e+00> : vector<8xf32>
    %32 = vector.multi_reduction <add>, %31, %cst_13 [1] : vector<8x64xf32> to vector<8xf32>
    %33 = vector.shape_cast %32 : vector<8xf32> to vector<8x1xf32>
    %cst_14 = arith.constant 6.400000e+01 : f32
    %34 = vector.broadcast %cst_14 : f32 to vector<8x1xf32>
    %35 = arith.divf %33, %34 : vector<8x1xf32>
    %cst_15 = arith.constant 9.99999974E-6 : f32
    %36 = vector.broadcast %cst_15 : f32 to vector<8x1xf32>
    %37 = arith.addf %35, %36 : vector<8x1xf32>
    %38 = math.rsqrt %37 : vector<8x1xf32>
    %39 = vector.broadcast %38 : vector<8x1xf32> to vector<8x64xf32>
    %40 = arith.mulf %30, %39 : vector<8x64xf32>
    %41 = arith.truncf %40 : vector<8x64xf32> to vector<8x64xbf16>
    %c0_16 = arith.constant 0 : index
    %c0_17 = arith.constant 0 : index
    %42 = vector.load %arg3[%c0_16, %c0_17] : memref<64x64xbf16, #tpu.memory_space<vmem>>, vector<64x64xbf16>
    %cst_18 = arith.constant dense<0.000000e+00> : vector<8x64xf32>
    %43 = tpu.matmul %41, %42, %cst_18 {dimension_numbers = #tpu.dot_dimension_numbers<[1], [0], [0], [1], [0, 0, 1, 1], [], []>} : vector<8x64xbf16>, vector<64x64xbf16>, vector<8x64xf32> -> vector<8x64xf32>
    %c0_19 = arith.constant 0 : index
    %c0_20 = arith.constant 0 : index
    %44 = vector.load %arg6[%c0_19, %c0_20] : memref<1x64xf32, #tpu.memory_space<vmem>>, vector<1x64xf32>
    %45 = vector.broadcast %44 : vector<1x64xf32> to vector<8x64xf32>
    %46 = arith.addf %43, %45 : vector<8x64xf32>
    %cst_21 = arith.constant 0.000000e+00 : f32
    %47 = vector.broadcast %cst_21 : f32 to vector<8x64xf32>
    %48 = arith.maximumf %46, %47 : vector<8x64xf32>
    %cst_22 = arith.constant dense<0.000000e+00> : vector<8xf32>
    %49 = vector.multi_reduction <add>, %48, %cst_22 [1] : vector<8x64xf32> to vector<8xf32>
    %50 = vector.shape_cast %49 : vector<8xf32> to vector<8x1xf32>
    %cst_23 = arith.constant 6.400000e+01 : f32
    %51 = vector.broadcast %cst_23 : f32 to vector<8x1xf32>
    %52 = arith.divf %50, %51 : vector<8x1xf32>
    %53 = vector.broadcast %52 : vector<8x1xf32> to vector<8x64xf32>
    %54 = arith.subf %48, %53 : vector<8x64xf32>
    %55 = arith.mulf %54, %54 : vector<8x64xf32>
    %cst_24 = arith.constant dense<0.000000e+00> : vector<8xf32>
    %56 = vector.multi_reduction <add>, %55, %cst_24 [1] : vector<8x64xf32> to vector<8xf32>
    %57 = vector.shape_cast %56 : vector<8xf32> to vector<8x1xf32>
    %cst_25 = arith.constant 6.400000e+01 : f32
    %58 = vector.broadcast %cst_25 : f32 to vector<8x1xf32>
    %59 = arith.divf %57, %58 : vector<8x1xf32>
    %cst_26 = arith.constant 9.99999974E-6 : f32
    %60 = vector.broadcast %cst_26 : f32 to vector<8x1xf32>
    %61 = arith.addf %59, %60 : vector<8x1xf32>
    %62 = math.rsqrt %61 : vector<8x1xf32>
    %63 = vector.broadcast %62 : vector<8x1xf32> to vector<8x64xf32>
    %64 = arith.mulf %54, %63 : vector<8x64xf32>
    %65 = arith.truncf %64 : vector<8x64xf32> to vector<8x64xbf16>
    %c0_27 = arith.constant 0 : index
    %c0_28 = arith.constant 0 : index
    %66 = vector.load %arg4[%c0_27, %c0_28] : memref<64x8xbf16, #tpu.memory_space<vmem>>, vector<64x8xbf16>
    %cst_29 = arith.constant dense<0.000000e+00> : vector<8x8xf32>
    %67 = tpu.matmul %65, %66, %cst_29 {dimension_numbers = #tpu.dot_dimension_numbers<[1], [0], [0], [1], [0, 0, 1, 1], [], []>} : vector<8x64xbf16>, vector<64x8xbf16>, vector<8x8xf32> -> vector<8x8xf32>
    %c0_30 = arith.constant 0 : index
    %c0_31 = arith.constant 0 : index
    %68 = vector.load %arg7[%c0_30, %c0_31] : memref<1x8xf32, #tpu.memory_space<vmem>>, vector<1x8xf32>
    %69 = vector.broadcast %68 : vector<1x8xf32> to vector<8x8xf32>
    %70 = arith.addf %67, %69 : vector<8x8xf32>
    %c0_32 = arith.constant 0 : index
    %c0_33 = arith.constant 0 : index
    %71 = vector.load %arg8[%c0_32, %c0_33] : memref<8x8xf32, #tpu.memory_space<vmem>>, vector<8x8xf32>
    tpu.vector_store %arg8[%c0_32, %c0_33], %70 {strides = array<i32>} : memref<8x8xf32, #tpu.memory_space<vmem>>, vector<8x8xf32>,
    return
  }
  func.func @transform_0(%arg0: i32) -> (i32, i32) {
    %c0_i32 = arith.constant 0 : i32
    %c0_i32_0 = arith.constant 0 : i32
    return %arg0, %c0_i32 : i32, i32
  }
  func.func @transform_1(%arg0: i32) -> (i32, i32) {
    %c0_i32 = arith.constant 0 : i32
    %c0_i32_0 = arith.constant 0 : i32
    %c0_i32_1 = arith.constant 0 : i32
    return %c0_i32, %c0_i32_0 : i32, i32
  }
  func.func @transform_2(%arg0: i32) -> (i32, i32) {
    %c0_i32 = arith.constant 0 : i32
    %c0_i32_0 = arith.constant 0 : i32
    %c0_i32_1 = arith.constant 0 : i32
    return %c0_i32, %c0_i32_0 : i32, i32
  }
  func.func @transform_3(%arg0: i32) -> (i32, i32) {
    %c0_i32 = arith.constant 0 : i32
    %c0_i32_0 = arith.constant 0 : i32
    %c0_i32_1 = arith.constant 0 : i32
    return %c0_i32, %c0_i32_0 : i32, i32
  }
  func.func @transform_4(%arg0: i32) -> (i32, i32) {
    %c0_i32 = arith.constant 0 : i32
    %c0_i32_0 = arith.constant 0 : i32
    %c0_i32_1 = arith.constant 0 : i32
    return %c0_i32, %c0_i32_0 : i32, i32
  }
  func.func @transform_5(%arg0: i32) -> (i32, i32) {
    %c0_i32 = arith.constant 0 : i32
    %c0_i32_0 = arith.constant 0 : i32
    %c0_i32_1 = arith.constant 0 : i32
    return %c0_i32, %c0_i32_0 : i32, i32
  }
  func.func @transform_6(%arg0: i32) -> (i32, i32) {
    %c0_i32 = arith.constant 0 : i32
    %c0_i32_0 = arith.constant 0 : i32
    %c0_i32_1 = arith.constant 0 : i32
    return %c0_i32, %c0_i32_0 : i32, i32
  }
  func.func @transform_7(%arg0: i32) -> (i32, i32) {
    %c0_i32 = arith.constant 0 : i32
    %c0_i32_0 = arith.constant 0 : i32
    return %arg0, %c0_i32 : i32, i32
  }
}

</mosaic_0001>

<llo_original>
// kernel: tpu_custom_call.1
$region0: #{tpu_custom_call.1}
  #allocation0 [shape = 'u32[]', space=smem, size = 0x4, offset = 0x4, fixed_abs, tag = 'smem constant byte address 0x4 - core index']
  #allocation1 [shape = 'u32[144,128]{1,0:T(1,128)}', space=vmem, size = 0x12000, scoped, tag = 'internal scratch']
  %s0 = inlined_call_operand.vmem [shape: f32[8,16], index: 0, kind: input, shape index: {}]
  %s1 = inlined_call_operand.hbm [shape: bf16[16,64], index: 1, kind: input, shape index: {}]
  %s2 = inlined_call_operand.vmem [shape: bf16[64,64], index: 2, kind: input, shape index: {}]
  %s3 = inlined_call_operand.vmem [shape: bf16[64,8], index: 3, kind: input, shape index: {}]
  %s4 = inlined_call_operand.vmem [shape: f32[1,64], index: 4, kind: input, shape index: {}]
  %s5 = inlined_call_operand.vmem [shape: f32[1,64], index: 5, kind: input, shape index: {}]
  %s6 = inlined_call_operand.vmem [shape: f32[1,8], index: 6, kind: input, shape index: {}]
  %s7 = inlined_call_operand.hbm [shape: f32[8,8], index: 7, kind: output, shape index: {}]
  %s8 = sld [smem:[#allocation0]]
  $region42: #{tpu_custom_call.1} parent=0
    _
  %s10 = ssub.s32 1, %s8
  %s11 = scalar_select 0, %s10, %s8
  $region1: #{tpu_custom_call.1} parent=0
    #allocation2 [shape = 'u8[4096]{0}', space=vmem, size = 0x1000, scoped, tag = 'input window, operand 1, single buffered']
    #allocation3 [shape = 's32[1]{0}', space=sflag, size = 0x4, scoped, tag = 'scoped memory for tpu_custom_call.1']
    #allocation4 [shape = 's32[1]{0}', space=sflag, size = 0x4, scoped, tag = 'scoped memory for tpu_custom_call.1']
    #allocation5 [shape = 'u8[4096]{0}', space=vmem, size = 0x1000, scoped, tag = 'output window, operand 0, single buffered']
    %12 = vsyncpa [#allocation3], 0
    %13 = vsyncpa [#allocation4], 0
    // Predicated region
    $region2: #{tpu_custom_call.1} parent=1 // pred_check
      _
    $region3: #{tpu_custom_call.1} parent=1 // pred_check_branch
      %15 = sbr.rel (0) target = $region5
    $region4: #{tpu_custom_call.1} parent=1 // pred_region
      _
    $region5: #{tpu_custom_call.1} parent=1 // pred_fallthru
      _
    // Predicated region
    $region6: #{tpu_custom_call.1} parent=1 // pred_check
      _
    $region7: #{tpu_custom_call.1} parent=1 // pred_check_branch
      %17 = sbr.rel (0) target = $region9
    $region8: #{tpu_custom_call.1} parent=1 // pred_region
      %s19 = ssub.s32 128, 128
      %20 = vsyncadd [#allocation3], %s19
      %s21 = sshll.u32 [#allocation2], 4
      %s22 = int_to_ptr.vmem [resolvable:$true] %s21
      %27 = dma.hbm_to_vmem [thread:$0]  %s1, 128, %s22, [#allocation3], 64, 64, 4
    $region9: #{tpu_custom_call.1} parent=1 // pred_fallthru
      _
    // Predicated region
    $region10: #{tpu_custom_call.1} parent=1 // pred_check
      _
    $region11: #{tpu_custom_call.1} parent=1 // pred_check_branch
      %29 = sbr.rel (0) target = $region13
    $region12: #{tpu_custom_call.1} parent=1 // pred_region
      _
    $region13: #{tpu_custom_call.1} parent=1 // pred_fallthru
      _
    // Predicated region
    $region14: #{tpu_custom_call.1} parent=1 // pred_check
      _
    $region15: #{tpu_custom_call.1} parent=1 // pred_check_branch
      %31 = sbr.rel (0) target = $region17
    $region16: #{tpu_custom_call.1} parent=1 // pred_region
      _
    $region17: #{tpu_custom_call.1} parent=1 // pred_fallthru
      _
    // Predicated region
    $region18: #{tpu_custom_call.1} parent=1 // pred_check
      _
    $region19: #{tpu_custom_call.1} parent=1 // pred_check_branch
      %33 = sbr.rel (0) target = $region21
    $region20: #{tpu_custom_call.1} parent=1 // pred_region
      _
    $region21: #{tpu_custom_call.1} parent=1 // pred_fallthru
      _
    // Predicated region
    $region22: #{tpu_custom_call.1} parent=1 // pred_check
      _
    $region23: #{tpu_custom_call.1} parent=1 // pred_check_branch
      %35 = sbr.rel (0) target = $region25
    $region24: #{tpu_custom_call.1} parent=1 // pred_region
      _
    $region25: #{tpu_custom_call.1} parent=1 // pred_fallthru
      _
    // Predicated region
    $region26: #{tpu_custom_call.1} parent=1 // pred_check
      _
    $region27: #{tpu_custom_call.1} parent=1 // pred_check_branch
      %37 = sbr.rel (0) target = $region29
    $region28: #{tpu_custom_call.1} parent=1 // pred_region
      _
    $region29: #{tpu_custom_call.1} parent=1 // pred_fallthru
      _
    // Predicated region
    $region30: #{tpu_custom_call.1} parent=1 // pred_check
      _
    $region31: #{tpu_custom_call.1} parent=1 // pred_check_branch
      %39 = sbr.rel (0) target = $region33
    $region32: #{tpu_custom_call.1} parent=1 // pred_region
      %40 = dma.done [#allocation3], 128
    $region33: #{tpu_custom_call.1} parent=1 // pred_fallthru
      _
    %v42 = vld [vmem:[%s0] sm:$0xff]
    %vm43 = vcmask 130048
    %v44 = vsel %vm43, %v42, 0.0
    %45 = vadd.xlane.f32.xlu0 %v44
    %v46 = vpop.xlane.xlu0 %45
    %v47 = vrcp.pop 16.0
    %v48 = vmul.f32 %v46, %v47
    %v49 = vsub.f32 %v42, %v48
    %v50 = vmul.f32 %v49, %v49
    %v51 = vsel %vm43, %v50, 0.0
    %52 = vadd.xlane.f32.xlu0 %v51
    %v53 = vpop.xlane.xlu0 %52
    %v54 = vmul.f32 %v53, %v47
    %v55 = vadd.f32 %v54, 1e-05
    %v56 = vrsqrt.pop %v55
    %v57 = vmul.f32 %v49, %v56
    %v58 = vpack.c.bf16 %v57, %v57
    %v59 = vld [vmem:[#allocation2] sm:$0xf]
    %v60 = vld [vmem:[#allocation2 + $0x4] sm:$0xf]
    %v61 = vld [vmem:[%s4] sm:$0x1]
    %v63 = vlaneseq
    %v64 = vshrl.u32 %v63, 7
    %v65 = vsub.s32 0, %v64
    %v66 = vrot.slane %v61, %v65
    %v70 = vunpack.c.l.b16 %v59
    %v71 = vunpack.c.l.b16 %v60
    %v72 = vpack.c.b16 %v71, %v70
    %v75 = vsel %vm43, %v58, 0
    %77 = vmatprep.subr.bf16.mxu0 0
    %78 = vmatpush1.bf16.msra.mxu0 %v72
    %79 = vmatprep.subr.bf16.mxu0 0
    %80 = vmatpush1.bf16.msra.mxu0 0
    %81 = vmatprep.subr.bf16.mxu0 0
    %82 = vmatpush1.bf16.msra.mxu0 0
    %83 = vmatprep.subr.bf16.mxu0 0
    %84 = vmatpush1.bf16.msra.mxu0 0
    %85 = vmatprep.subr.bf16.mxu0 0
    %86 = vmatpush1.bf16.msra.mxu0 0
    %87 = vmatprep.subr.bf16.mxu0 0
    %88 = vmatpush1.bf16.msra.mxu0 0
    %89 = vmatprep.subr.bf16.mxu0 0
    %90 = vmatpush1.bf16.msra.mxu0 0
    %91 = vmatprep.subr.bf16.mxu0 0
    %92 = vmatpush1.bf16.msra.mxu0 0
    %93 = vmatprep.subr.bf16.mxu0 0
    %94 = vmatpush1.bf16.msra.mxu0 0
    %95 = vmatprep.subr.bf16.mxu0 0
    %96 = vmatpush1.bf16.msra.mxu0 0
    %97 = vmatprep.subr.bf16.mxu0 0
    %98 = vmatpush1.bf16.msra.mxu0 0
    %99 = vmatprep.subr.bf16.mxu0 0
    %100 = vmatpush1.bf16.msra.mxu0 0
    %101 = vmatprep.subr.bf16.mxu0 0
    %102 = vmatpush1.bf16.msra.mxu0 0
    %103 = vmatprep.subr.bf16.mxu0 0
    %104 = vmatpush1.bf16.msra.mxu0 0
    %105 = vmatprep.subr.bf16.mxu0 0
    %106 = vmatpush1.bf16.msra.mxu0 0
    %107 = vmatprep.subr.bf16.mxu0 0
    %108 = vmatpush1.bf16.msra.mxu0 0
    %109 = vmatprep.mubr.bf16.mxu0 0
    %110 = vmatmul.mubr.bf16.gmra.mrb[0].mxu0 %v75
    %v111 = vpop.f32.mrb[0].mxu0
    %v112 = vadd.f32 %v66, %v111
    %v113 = vpop.f32.mrb[0].mxu0
    %v114 = vpop.f32.mrb[0].mxu0
    %v115 = vpop.f32.mrb[0].mxu0
    %116 = vdwg.mxu0
    %v117 = vmax.f32 %v112, 0.0
    %vm118 = vcmask 523264
    %v119 = vsel %vm118, %v117, 0.0
    %120 = vadd.xlane.f32.xlu0 %v119
    %v121 = vpop.xlane.xlu0 %120
    %v122 = vrcp.pop 64.0
    %v123 = vmul.f32 %v121, %v122
    %v124 = vsub.f32 %v117, %v123
    %v125 = vmul.f32 %v124, %v124
    %v126 = vsel %vm118, %v125, 0.0
    %127 = vadd.xlane.f32.xlu0 %v126
    %v128 = vpop.xlane.xlu0 %127
    %v129 = vmul.f32 %v128, %v122
    %v130 = vadd.f32 %v129, 1e-05
    %v131 = vrsqrt.pop %v130
    %v132 = vmul.f32 %v124, %v131
    %v133 = vpack.c.bf16 %v132, %v132
    %v134 = vld [vmem:[%s2] sm:$0xf]
    %v135 = vld [vmem:[%s2 + $0x4] sm:$0xf]
    %v136 = vld [vmem:[%s2 + $0x8] sm:$0xf]
    %v137 = vld [vmem:[%s2 + $0xc] sm:$0xf]
    %v138 = vld [vmem:[%s2 + $0x10] sm:$0xf]
    %v139 = vld [vmem:[%s2 + $0x14] sm:$0xf]
    %v140 = vld [vmem:[%s2 + $0x18] sm:$0xf]
    %v141 = vld [vmem:[%s2 + $0x1c] sm:$0xf]
    %v142 = vld [vmem:[%s5] sm:$0x1]
    %v144 = vlaneseq
    %v145 = vshrl.u32 %v144, 7
    %v146 = vsub.s32 0, %v145
    %v147 = vrot.slane %v142, %v146
    %v157 = vunpack.c.l.b16 %v134
    %v158 = vunpack.c.l.b16 %v135
    %v159 = vunpack.c.l.b16 %v136
    %v160 = vunpack.c.l.b16 %v137
    %v161 = vunpack.c.l.b16 %v138
    %v162 = vunpack.c.l.b16 %v139
    %v163 = vunpack.c.l.b16 %v140
    %v164 = vunpack.c.l.b16 %v141
    %v165 = vpack.c.b16 %v158, %v157
    %v166 = vpack.c.b16 %v160, %v159
    %v167 = vpack.c.b16 %v162, %v161
    %v168 = vpack.c.b16 %v164, %v163
    %v174 = vsel %vm118, %v133, 0
    %176 = vmatprep.subr.bf16.mxu0 0
    %177 = vmatpush1.bf16.msra.mxu0 %v165
    %178 = vmatprep.subr.bf16.mxu0 0
    %179 = vmatpush1.bf16.msra.mxu0 %v166
    %180 = vmatprep.subr.bf16.mxu0 0
    %181 = vmatpush1.bf16.msra.mxu0 %v167
    %182 = vmatprep.subr.bf16.mxu0 0
    %183 = vmatpush1.bf16.msra.mxu0 %v168
    %184 = vmatprep.subr.bf16.mxu0 0
    %185 = vmatpush1.bf16.msra.mxu0 0
    %186 = vmatprep.subr.bf16.mxu0 0
    %187 = vmatpush1.bf16.msra.mxu0 0
    %188 = vmatprep.subr.bf16.mxu0 0
    %189 = vmatpush1.bf16.msra.mxu0 0
    %190 = vmatprep.subr.bf16.mxu0 0
    %191 = vmatpush1.bf16.msra.mxu0 0
    %192 = vmatprep.subr.bf16.mxu0 0
    %193 = vmatpush1.bf16.msra.mxu0 0
    %194 = vmatprep.subr.bf16.mxu0 0
    %195 = vmatpush1.bf16.msra.mxu0 0
    %196 = vmatprep.subr.bf16.mxu0 0
    %197 = vmatpush1.bf16.msra.mxu0 0
    %198 = vmatprep.subr.bf16.mxu0 0
    %199 = vmatpush1.bf16.msra.mxu0 0
    %200 = vmatprep.subr.bf16.mxu0 0
    %201 = vmatpush1.bf16.msra.mxu0 0
    %202 = vmatprep.subr.bf16.mxu0 0
    %203 = vmatpush1.bf16.msra.mxu0 0
    %204 = vmatprep.subr.bf16.mxu0 0
    %205 = vmatpush1.bf16.msra.mxu0 0
    %206 = vmatprep.subr.bf16.mxu0 0
    %207 = vmatpush1.bf16.msra.mxu0 0
    %208 = vmatprep.mubr.bf16.mxu0 0
    %209 = vmatmul.mubr.bf16.gmra.mrb[0].mxu0 %v174
    %v210 = vpop.f32.mrb[0].mxu0
    %v211 = vadd.f32 %v147, %v210
    %v212 = vpop.f32.mrb[0].mxu0
    %v213 = vpop.f32.mrb[0].mxu0
    %v214 = vpop.f32.mrb[0].mxu0
    %215 = vdwg.mxu0
    %v216 = vmax.f32 %v211, 0.0
    %v217 = vsel %vm118, %v216, 0.0
    %218 = vadd.xlane.f32.xlu0 %v217
    %v219 = vpop.xlane.xlu0 %218
    %v220 = vmul.f32 %v219, %v122
    %v221 = vsub.f32 %v216, %v220
    %v222 = vmul.f32 %v221, %v221
    %v223 = vsel %vm118, %v222, 0.0
    %224 = vadd.xlane.f32.xlu0 %v223
    %v225 = vpop.xlane.xlu0 %224
    %v226 = vmul.f32 %v225, %v122
    %v227 = vadd.f32 %v226, 1e-05
    %v228 = vrsqrt.pop %v227
    %v229 = vmul.f32 %v221, %v228
    %v230 = vpack.c.bf16 %v229, %v229
    %v231 = vld [vmem:[%s3] sm:$0xf]
    %v232 = vld [vmem:[%s3 + $0x4] sm:$0xf]
    %v233 = vld [vmem:[%s3 + $0x8] sm:$0xf]
    %v234 = vld [vmem:[%s3 + $0xc] sm:$0xf]
    %v235 = vld [vmem:[%s3 + $0x10] sm:$0xf]
    %v236 = vld [vmem:[%s3 + $0x14] sm:$0xf]
    %v237 = vld [vmem:[%s3 + $0x18] sm:$0xf]
    %v238 = vld [vmem:[%s3 + $0x1c] sm:$0xf]
    %v239 = vld [vmem:[%s6] sm:$0x1]
    %v241 = vlaneseq
    %v242 = vshrl.u32 %v241, 7
    %v243 = vsub.s32 0, %v242
    %v244 = vrot.slane %v239, %v243
    %v254 = vunpack.c.l.b16 %v231
    %v255 = vunpack.c.l.b16 %v232
    %v256 = vunpack.c.l.b16 %v233
    %v257 = vunpack.c.l.b16 %v234
    %v258 = vunpack.c.l.b16 %v235
    %v259 = vunpack.c.l.b16 %v236
    %v260 = vunpack.c.l.b16 %v237
    %v261 = vunpack.c.l.b16 %v238
    %v262 = vpack.c.b16 %v255, %v254
    %v263 = vpack.c.b16 %v257, %v256
    %v264 = vpack.c.b16 %v259, %v258
    %v265 = vpack.c.b16 %v261, %v260
    %v271 = vsel %vm118, %v230, 0
    %273 = vmatprep.subr.bf16.mxu0 0
    %274 = vmatpush1.bf16.msra.mxu0 %v262
    %275 = vmatprep.subr.bf16.mxu0 0
    %276 = vmatpush1.bf16.msra.mxu0 %v263
    %277 = vmatprep.subr.bf16.mxu0 0
    %278 = vmatpush1.bf16.msra.mxu0 %v264
    %279 = vmatprep.subr.bf16.mxu0 0
    %280 = vmatpush1.bf16.msra.mxu0 %v265
    %281 = vmatprep.subr.bf16.mxu0 0
    %282 = vmatpush1.bf16.msra.mxu0 0
    %283 = vmatprep.subr.bf16.mxu0 0
    %284 = vmatpush1.bf16.msra.mxu0 0
    %285 = vmatprep.subr.bf16.mxu0 0
    %286 = vmatpush1.bf16.msra.mxu0 0
    %287 = vmatprep.subr.bf16.mxu0 0
    %288 = vmatpush1.bf16.msra.mxu0 0
    %289 = vmatprep.subr.bf16.mxu0 0
    %290 = vmatpush1.bf16.msra.mxu0 0
    %291 = vmatprep.subr.bf16.mxu0 0
    %292 = vmatpush1.bf16.msra.mxu0 0
    %293 = vmatprep.subr.bf16.mxu0 0
    %294 = vmatpush1.bf16.msra.mxu0 0
    %295 = vmatprep.subr.bf16.mxu0 0
    %296 = vmatpush1.bf16.msra.mxu0 0
    %297 = vmatprep.subr.bf16.mxu0 0
    %298 = vmatpush1.bf16.msra.mxu0 0
    %299 = vmatprep.subr.bf16.mxu0 0
    %300 = vmatpush1.bf16.msra.mxu0 0
    %301 = vmatprep.subr.bf16.mxu0 0
    %302 = vmatpush1.bf16.msra.mxu0 0
    %303 = vmatprep.subr.bf16.mxu0 0
    %304 = vmatpush1.bf16.msra.mxu0 0
    %305 = vmatprep.mubr.bf16.mxu0 0
    %306 = vmatmul.mubr.bf16.gmra.mrb[0].mxu0 %v271
    %v307 = vpop.f32.mrb[0].mxu0
    %v308 = vadd.f32 %v244, %v307
    %v309 = vpop.f32.mrb[0].mxu0
    %v310 = vpop.f32.mrb[0].mxu0
    %v311 = vpop.f32.mrb[0].mxu0
    %312 = vdwg.mxu0
    %vm313 = vcmask 64512
    %314 = vst.msk [vmem:[#allocation5] sm:$0xff] %vm313, %v308
    // Predicated region
    $region34: #{tpu_custom_call.1} parent=1 // pred_check
      _
    $region35: #{tpu_custom_call.1} parent=1 // pred_check_branch
      %316 = sbr.rel (0) target = $region37
    $region36: #{tpu_custom_call.1} parent=1 // pred_region
      %s318 = ssub.s32 128, 128
      %319 = vsyncadd [#allocation4], %s318
      %s321 = sshll.u32 [#allocation5], 4
      %s322 = int_to_ptr.vmem [resolvable:$true] %s321
      %324 = dma.vmem_to_hbm [thread:$0]  %s322, 128, %s7, [#allocation4]
    $region37: #{tpu_custom_call.1} parent=1 // pred_fallthru
      _
    // Predicated region
    $region38: #{tpu_custom_call.1} parent=1 // pred_check
      _
    $region39: #{tpu_custom_call.1} parent=1 // pred_check_branch
      %326 = sbr.rel (0) target = $region41
    $region40: #{tpu_custom_call.1} parent=1 // pred_region
      %327 = dma.done [#allocation4], 128
    $region41: #{tpu_custom_call.1} parent=1 // pred_fallthru
      _
    %328 = vsyncpa [#allocation3], 1
    %329 = vsyncpa [#allocation4], 1

</llo_original>
